<compile_context>
chip_gen: v6e
topology: v6e:2x2x1
jax: 0.10.0
libtpu: 0.0.40
codegen_flags: <defaults>
</compile_context>

<pallas_src>
import jax
import jax.numpy as jnp
from jax.experimental import pallas as pl
from jax.experimental.pallas import tpu as pltpu


# ---------------------------------------------------------------------------
# helpers (glue)
# ---------------------------------------------------------------------------
def _round_up(v, m):
    return ((v + m - 1) // m) * m


_VMEM_CAP = None


def _vmem_capacity():
    """Physical per-core VMEM bytes (generation-aware), with a safe fallback."""
    global _VMEM_CAP
    if _VMEM_CAP is None:
        cap = 0
        try:
            cap = int(pltpu.get_tpu_info().vmem_capacity_bytes)
        except Exception:
            cap = 0
        _VMEM_CAP = cap if cap > 0 else (64 << 20)   # conservative: v7x per-TC
    return _VMEM_CAP


def _vmem_budget():
    # ~48 MiB on v7x (64 MiB physical), ~96 MiB on v5e/v6e (128 MiB physical);
    # leaves headroom for compiler-internal scratch and semaphores.
    return int(_vmem_capacity() * 0.75)


def _vmem_limit(need):
    # need + small margin, never the full physical capacity.
    return int(min(int(_vmem_capacity() * 0.9), max(32 << 20, need + (4 << 20))))


def _initial_tm(M):
    """Row-tile choice: cap at ~512 rows, but keep >= 2 M tiles when there is
    enough work so both v7x TensorCores get a 'parallel' slice of the kernel."""
    mt = max(1, -(-M // 512))
    if M > 256 and mt == 1:
        mt = 2
    return _round_up(-(-M // mt), 8)


def _pick_fused(M, N, K, itemsize, budget, min_tm):
    """Tiles for the full-K-resident fused kernel.  Shrinks tn before tm:
    tn only changes the per-step tile, while shrinking tm multiplies total
    weight HBM traffic (mt * N * K).  Returns (tm, tn, need_bytes, fits)."""
    tn_cands = [t for t in (512, 256, 128) if N % t == 0] or [N]
    tm = min(_initial_tm(M), 512)

    def need(tm_, tn_):
        return (2 * (tm_ + tn_) * K * itemsize   # x row block + weight tile (2-buffered)
                + 2 * tm_ * tn_ * 4              # output tiles
                + 2 * tn_ * 4 + 2 * K * 4)       # bias row + col_norm partial

    tn = tn_cands[0]
    for t in tn_cands:                            # shrink tn first
        tn = t
        if need(tm, t) <= budget:
            break
    while need(tm, tn) > budget and tm > min_tm:  # then tm, down to min_tm
        tm = max(min_tm, _round_up(tm // 2, 8))
    return tm, tn, need(tm, tn), need(tm, tn) <= budget


def _pick_ktiled(M, N, K, itemsize, budget):
    """Tiles for the K-tiled (accumulator) kernel, or None if not applicable
    (K not a multiple of a supported tk, or only a single k step)."""
    tk = next((t for t in (1024, 512, 256) if K % t == 0), None)
    if tk is None or K // tk < 2:
        return None
    tn = next((t for t in (512, 256, 128) if N % t == 0), N)
    tm = min(_initial_tm(M), 512)

    def need(tm_, tn_):
        return (2 * (tm_ + tn_) * tk * itemsize   # x + weight k-tiles (2-buffered)
                + 3 * tm_ * tn_ * 4               # output tiles + f32 accumulator
                + 2 * tn_ * 4)

    while need(tm, tn) > budget and tn > 128 and N % (tn // 2) == 0:
        tn //= 2
    while need(tm, tn) > budget and tm > 8:
        tm = max(8, _round_up(tm // 2, 8))
    return tm, tn, tk, need(tm, tn)


# ---------------------------------------------------------------------------
# Kernels
# ---------------------------------------------------------------------------
def _proj_colnorm_kernel(x_ref, w_ref, b_ref, o_ref, cn_ref):
    x = x_ref[...]                                                    # (tm, K)
    acc = jnp.dot(x, w_ref[...], preferred_element_type=jnp.float32)  # (tm, tn) MXU
    o_ref[...] = (acc + b_ref[...].astype(jnp.float32)).astype(o_ref.dtype)

    # col_norm contribution of this M tile (== column sums of F.normalize(x)^2),
    # computed once per M tile on the first N step, hidden under the MXU work.
    @pl.when(pl.program_id(1) == 0)
    def _():
        xf = x.astype(jnp.float32)
        sq = xf * xf
        row_sq = jnp.sum(sq, axis=1, keepdims=True)                    # (tm, 1)
        inv = pl.reciprocal(jnp.maximum(row_sq, 1e-24), approx=True)   # EUP slot
        cn_ref[...] = jnp.sum(sq * inv, axis=0, keepdims=True)[None]   # (1, 1, K)


def _proj_bias_kernel(x_ref, w_ref, b_ref, o_ref):
    acc = jnp.dot(x_ref[...], w_ref[...], preferred_element_type=jnp.float32)
    o_ref[...] = (acc + b_ref[...].astype(jnp.float32)).astype(o_ref.dtype)


def _proj_bias_ktiled_kernel(x_ref, w_ref, b_ref, o_ref, acc_ref):
    k = pl.program_id(2)

    @pl.when(k == 0)
    def _():
        acc_ref[...] = jnp.zeros_like(acc_ref)

    acc_ref[...] += jnp.dot(x_ref[...], w_ref[...],
                            preferred_element_type=jnp.float32)

    @pl.when(k == pl.num_programs(2) - 1)
    def _():
        o_ref[...] = (acc_ref[...] + b_ref[...].astype(jnp.float32)
                      ).astype(o_ref.dtype)


def _colnorm_kernel(x_ref, cn_ref):
    xf = x_ref[...].astype(jnp.float32)
    sq = xf * xf
    row_sq = jnp.sum(sq, axis=1, keepdims=True)
    inv = pl.reciprocal(jnp.maximum(row_sq, 1e-24), approx=True)
    cn_ref[...] = jnp.sum(sq * inv, axis=0, keepdims=True)[None]


# ---------------------------------------------------------------------------
# Wrappers
# ---------------------------------------------------------------------------
def colnorm_pallas(x):
    """col_norm[k] = sum_m x[m,k]^2 / max(||x_m||^2, eps^2);  x:(M,K) -> (K,)."""
    M, K = x.shape
    itemsize = x.dtype.itemsize
    budget = _vmem_budget()
    tm = min(_round_up(M, 8), 1024)
    while tm > 8 and (2 * tm * K * itemsize + 2 * K * 4) > budget:
        tm = max(8, _round_up(tm // 2, 8))
    Mp = _round_up(M, tm)
    x_p = jnp.pad(x, ((0, Mp - M), (0, 0))) if Mp != M else x   # zero rows are inert
    mt = Mp // tm
    need = 2 * tm * K * itemsize + 2 * K * 4
    cn_part = pl.pallas_call(
        _colnorm_kernel,
        out_shape=jax.ShapeDtypeStruct((mt, 1, K), jnp.float32),
        grid_spec=pltpu.PrefetchScalarGridSpec(
            num_scalar_prefetch=0,
            grid=(mt,),
            in_specs=[pl.BlockSpec((tm, K), lambda i: (i, 0))],
            out_specs=pl.BlockSpec((1, 1, K), lambda i: (i, 0, 0)),
        ),
        compiler_params=pltpu.CompilerParams(
            dimension_semantics=("parallel",),
            vmem_limit_bytes=_vmem_limit(need),
        ),
    )(x_p)
    return jnp.sum(cn_part[:, 0, :], axis=0)


def griffin_prefill_pallas(x, w_t, bias, *, force_ktiled=False):
    """x:(M,K), w_t:(K,N), bias:(N,)  ->  (out:(M,N), col_norm:(K,))."""
    M, K = x.shape
    K2, N = w_t.shape
    assert K == K2
    itemsize = x.dtype.itemsize
    budget = _vmem_budget()
    b2 = bias.reshape(1, N)

    fused = _pick_fused(M, N, K, itemsize, budget, min_tm=256)
    ktiled = _pick_ktiled(M, N, K, itemsize, budget)
    use_ktiled = ktiled is not None and (force_ktiled or not fused[3])

    if not use_ktiled:
        tm, tn, need, fits = fused
        if not fits:   # last resort: full-K residency with small row tiles
            tm, tn, need, _ = _pick_fused(M, N, K, itemsize, budget, min_tm=8)
        Mp = _round_up(M, tm)
        x_p = jnp.pad(x, ((0, Mp - M), (0, 0))) if Mp != M else x
        mt, nt = Mp // tm, N // tn
        out, cn_part = pl.pallas_call(
            _proj_colnorm_kernel,
            out_shape=(
                jax.ShapeDtypeStruct((Mp, N), x.dtype),
                jax.ShapeDtypeStruct((mt, 1, K), jnp.float32),
            ),
            grid_spec=pltpu.PrefetchScalarGridSpec(
                num_scalar_prefetch=0,
                grid=(mt, nt),
                in_specs=[
                    pl.BlockSpec((tm, K), lambda i, j: (i, 0)),  # x: read once per i
                    pl.BlockSpec((K, tn), lambda i, j: (0, j)),  # pre-transposed weight
                    pl.BlockSpec((1, tn), lambda i, j: (0, j)),  # bias
                ],
                out_specs=[
                    pl.BlockSpec((tm, tn), lambda i, j: (i, j)),
                    pl.BlockSpec((1, 1, K), lambda i, j: (i, 0, 0)),
                ],
            ),
            compiler_params=pltpu.CompilerParams(
                # j stays 'arbitrary' because the col_norm block is shared across
                # j; megacore utilisation comes from keeping mt >= 2 (see _initial_tm).
                dimension_semantics=("parallel", "arbitrary"),
                vmem_limit_bytes=_vmem_limit(need),
            ),
        )(x_p, w_t, b2)
        col_norm = jnp.sum(cn_part[:, 0, :], axis=0)   # tiny (mt,K)->(K,) glue sum
        return out[:M], col_norm

    # ---------------- large-K path: K-tiled projection with f32 accumulator --
    tm, tn, tk, need = ktiled
    Mp = _round_up(M, tm)
    x_p = jnp.pad(x, ((0, Mp - M), (0, 0))) if Mp != M else x
    mt, nt, kt = Mp // tm, N // tn, K // tk
    # TODO(synk): for heavily exposed-DMA configs add pipeline_mode=pl.Buffered(3)
    # on the weight BlockSpec.
    out = pl.pallas_call(
        _proj_bias_ktiled_kernel,
        out_shape=jax.ShapeDtypeStruct((Mp, N), x.dtype),
        grid_spec=pltpu.PrefetchScalarGridSpec(
            num_scalar_prefetch=0,
            grid=(mt, nt, kt),
            in_specs=[
                pl.BlockSpec((tm, tk), lambda i, j, k: (i, k)),
                pl.BlockSpec((tk, tn), lambda i, j, k: (k, j)),
                pl.BlockSpec((1, tn), lambda i, j, k: (0, j)),
            ],
            out_specs=pl.BlockSpec((tm, tn), lambda i, j, k: (i, j)),
            scratch_shapes=[pltpu.VMEM((tm, tn), jnp.float32)],
        ),
        compiler_params=pltpu.CompilerParams(
            dimension_semantics=("parallel", "parallel", "arbitrary"),
            vmem_limit_bytes=_vmem_limit(need),
        ),
    )(x_p, w_t, b2)
    # col_norm: small separate streaming pass over x (x traffic << weight traffic).
    return out[:M], colnorm_pallas(x)


def griffin_decode_pallas(x_slice, w_t_slice, bias):
    """x_slice:(M,Kc), w_t_slice:(Kc,N), bias:(N,) -> (M,N).  M untiled."""
    M, Kc = x_slice.shape
    Kc2, N = w_t_slice.shape
    assert Kc == Kc2
    itemsize = x_slice.dtype.itemsize
    budget = _vmem_budget()
    tm = _round_up(M, 8)
    x_p = jnp.pad(x_slice, ((0, tm - M), (0, 0))) if tm != M else x_slice

    def need(tn_):
        return 2 * (tm + tn_) * Kc * itemsize + 2 * tm * tn_ * 4 + 2 * tn_ * 4

    # fewest, largest lane-dense N tiles that fit (decode is weight-BW bound)
    tn_cands = [N] + [t for t in (2048, 1024, 512, 256, 128) if N % t == 0]
    tn = next((t for t in tn_cands if need(t) <= budget), tn_cands[-1])
    nt = N // tn
    b2 = bias.reshape(1, N)
    out = pl.pallas_call(
        _proj_bias_kernel,
        out_shape=jax.ShapeDtypeStruct((tm, N), x_slice.dtype),
        grid_spec=pltpu.PrefetchScalarGridSpec(
            num_scalar_prefetch=0,
            grid=(nt,),
            in_specs=[
                pl.BlockSpec((tm, Kc), lambda j: (0, 0)),
                pl.BlockSpec((Kc, tn), lambda j: (0, j)),
                pl.BlockSpec((1, tn), lambda j: (0, j)),
            ],
            out_specs=pl.BlockSpec((tm, tn), lambda j: (0, j)),
        ),
        compiler_params=pltpu.CompilerParams(
            dimension_semantics=("parallel",),
            vmem_limit_bytes=_vmem_limit(need(tn)),
        ),
    )(x_p, w_t_slice, b2)
    return out[:M]


# ---------------------------------------------------------------------------
# Module wrapper mirroring GriffinLinear semantics
# ---------------------------------------------------------------------------
class GriffinLinearPallas:
    def __init__(self, in_features, out_features, topk_ratio, weight, bias):
        self.in_features = in_features
        self.out_features = out_features
        self.topk_ratio = float(topk_ratio)
        self.topk = int(in_features * self.topk_ratio)
        self.weight = weight                      # (N, K), API-compatible view
        self.weight_t = jnp.asarray(weight).T     # (K, N): one-time transpose,
                                                  # native MXU RHS layout
        self.bias = bias                          # (N,)
        self.indices = []
        self.weight_slices = []                   # (Kc, N) row-gathered slices
        self._slice_kc = []
        self.last_col_norm = None

    def clear_slices(self):
        self.indices = []
        self.weight_slices = []
        self._slice_kc = []

    def cache_slice(self, indices):
        # Row gather on the pre-transposed weight (sublane axis, cheap), then
        # zero-pad the contraction dim to a lane multiple (exact: zero rows inert).
        w_slice = self.weight_t[indices, :]       # (topk, N)
        kc = _round_up(w_slice.shape[0], 128)
        if kc != w_slice.shape[0]:
            w_slice = jnp.pad(w_slice, ((0, kc - w_slice.shape[0]), (0, 0)))
        self.indices.append(indices)
        self.weight_slices.append(w_slice)
        self._slice_kc.append(kc)

    def forward(self, x):
        bsz, seq, _ = x.shape
        if seq != 1:
            xf = x.reshape(bsz * seq, -1)
            # fused MXU projection + column statistic (single pass over x)
            out, col_norm = griffin_prefill_pallas(xf, self.weight_t, self.bias)
            self.last_col_norm = col_norm
            # top-k index selection (lax.top_k instead of a full argsort)
            _, topk_indices = jax.lax.top_k(jnp.abs(col_norm), self.topk)
            self.clear_slices()
            self.cache_slice(topk_indices)
            return out.reshape(bsz, seq, -1)

        # decode path (seq == 1): cached sparse slice
        xf = x.reshape(bsz, -1)
        idx = self.indices[0]
        w_slice = self.weight_slices[0]           # (Kc, N)
        kc = self._slice_kc[0]
        # TODO(synk): fuse this column gather into the decode kernel via
        # scalar-prefetch (indices in SMEM) instead of a separate XLA gather.
        x_slice = jnp.take(xf, idx, axis=1)       # (bsz, topk)
        if kc != x_slice.shape[1]:
            x_slice = jnp.pad(x_slice, ((0, 0), (0, kc - x_slice.shape[1])))
        out = griffin_decode_pallas(x_slice, w_slice, self.bias)
        return out.reshape(bsz, 1, -1)


# TODO(synk): get_recall / find_closest are host-side Python set-intersection
# utilities with no kernel equivalent; omitted from the device path.

if __name__ == "__main__":
    key = jax.random.PRNGKey(0)
    bsz, seq, in_features, out_features = 2, 8, 256, 128
    topk_ratio = 0.5

    k1, k2, k3, k4, k5, k6 = jax.random.split(key, 6)
    weight = jax.random.normal(k1, (out_features, in_features), jnp.float32) * 0.02
    bias = jax.random.normal(k2, (out_features,), jnp.float32) * 0.02
    x = jax.random.normal(k3, (bsz, seq, in_features), jnp.float32)

    mod = GriffinLinearPallas(in_features, out_features, topk_ratio, weight, bias)

    # --- prefill path (seq != 1): fused projection + col_norm statistic ---
    out = jax.block_until_ready(mod.forward(x))
    xf = x.reshape(bsz * seq, -1)
    ref = (xf @ weight.T + bias).reshape(bsz, seq, -1)
    assert out.shape == (bsz, seq, out_features)
    assert jnp.allclose(out, ref, atol=1e-3, rtol=1e-3)

    row_nrm = jnp.maximum(jnp.linalg.norm(xf, axis=1, keepdims=True), 1e-12)
    cn_ref = jnp.sum((xf / row_nrm) ** 2, axis=0)
    # loose tolerance: per-row normalization uses the approximate EUP reciprocal,
    # which only feeds top-k index selection.
    assert jnp.allclose(mod.last_col_norm, cn_ref, atol=1e-4, rtol=5e-2)

    # --- decode path (seq == 1) using the cached top-k slice ---
    x_dec = jax.random.normal(k4, (bsz, 1, in_features), jnp.float32)
    out_dec = jax.block_until_ready(mod.forward(x_dec))
    idx = mod.indices[0]
    ref_dec = (x_dec.reshape(bsz, -1)[:, idx] @ weight[:, idx].T + bias).reshape(
        bsz, 1, -1
    )
    assert out_dec.shape == (bsz, 1, out_features)
    assert jnp.allclose(out_dec, ref_dec, atol=1e-3, rtol=1e-3)

    # --- large-K fallback: K-tiled projection (accumulator) + separate col_norm ---
    K_big, N_big = 2048, 256
    w2 = jax.random.normal(k5, (N_big, K_big), jnp.float32) * 0.02
    x2 = jax.random.normal(k6, (bsz * seq, K_big), jnp.float32)
    b2 = jnp.zeros((N_big,), jnp.float32)
    out2, cn2 = griffin_prefill_pallas(x2, w2.T, b2, force_ktiled=True)
    out2 = jax.block_until_ready(out2)
    ref2 = x2 @ w2.T
    assert jnp.allclose(out2, ref2, atol=2e-2, rtol=2e-2)
    rn2 = jnp.maximum(jnp.linalg.norm(x2, axis=1, keepdims=True), 1e-12)
    cn2_ref = jnp.sum((x2 / rn2) ** 2, axis=0)
    assert jnp.allclose(cn2, cn2_ref, atol=1e-4, rtol=5e-2)

    print("KERNEL_OK")
</pallas_src>

<mosaic_0001>
module attributes {stable_mosaic.version = 11 : i64} {
  func.func @_proj_colnorm_kernel(%arg0: i32, %arg1: i32, %arg2: memref<16x256xf32, #tpu.memory_space<vmem>>, %arg3: memref<256x128xf32, #tpu.memory_space<vmem>>, %arg4: memref<1x128xf32, #tpu.memory_space<vmem>>, %arg5: memref<16x128xf32, #tpu.memory_space<vmem>>, %arg6: memref<1x1x256xf32, #tpu.memory_space<vmem>>) attributes {dimension_semantics = [#tpu.dimension_semantics<parallel>, #tpu.dimension_semantics<arbitrary>], iteration_bounds = array<i64: 1, 1>, scalar_prefetch = 0 : i64, scratch_operands = 0 : i64, tpu.core_type = #tpu.core_type<tc>, window_params = [{transform_indices = @transform_0, window_bounds = array<i64: 16, 256>}, {transform_indices = @transform_1, window_bounds = array<i64: 256, 128>}, {transform_indices = @transform_2, window_bounds = array<i64: 1, 128>}, {transform_indices = @transform_3, window_bounds = array<i64: 16, 128>}, {transform_indices = @transform_4, window_bounds = array<i64: 1, 1, 256>}]} {
    %c0 = arith.constant 0 : index
    %c0_0 = arith.constant 0 : index
    %0 = vector.load %arg2[%c0, %c0_0] : memref<16x256xf32, #tpu.memory_space<vmem>>, vector<16x256xf32>
    %c0_1 = arith.constant 0 : index
    %c0_2 = arith.constant 0 : index
    %1 = vector.load %arg3[%c0_1, %c0_2] : memref<256x128xf32, #tpu.memory_space<vmem>>, vector<256x128xf32>
    %cst = arith.constant dense<0.000000e+00> : vector<16x128xf32>
    %2 = tpu.matmul %0, %1, %cst {dimension_numbers = #tpu.dot_dimension_numbers<[1], [0], [0], [1], [0, 0, 1, 1], [], []>} : vector<16x256xf32>, vector<256x128xf32>, vector<16x128xf32> -> vector<16x128xf32>
    %c0_3 = arith.constant 0 : index
    %c0_4 = arith.constant 0 : index
    %3 = vector.load %arg4[%c0_3, %c0_4] : memref<1x128xf32, #tpu.memory_space<vmem>>, vector<1x128xf32>
    %4 = vector.broadcast %3 : vector<1x128xf32> to vector<16x128xf32>
    %5 = arith.addf %2, %4 : vector<16x128xf32>
    %c0_5 = arith.constant 0 : index
    %c0_6 = arith.constant 0 : index
    %6 = vector.load %arg5[%c0_5, %c0_6] : memref<16x128xf32, #tpu.memory_space<vmem>>, vector<16x128xf32>
    tpu.vector_store %arg5[%c0_5, %c0_6], %5 {strides = array<i32>} : memref<16x128xf32, #tpu.memory_space<vmem>>, vector<16x128xf32>,
    %c0_i32 = arith.constant 0 : i32
    %7 = arith.cmpi eq, %arg1, %c0_i32 : i32
    %8 = arith.extui %7 : i1 to i32
    %c0_i32_7 = arith.constant 0 : i32
    %9 = arith.cmpi ne, %8, %c0_i32_7 : i32
    scf.if %9 {
      %10 = arith.mulf %0, %0 : vector<16x256xf32>
      %cst_8 = arith.constant dense<0.000000e+00> : vector<16xf32>
      %11 = vector.multi_reduction <add>, %10, %cst_8 [1] : vector<16x256xf32> to vector<16xf32>
      %12 = vector.shape_cast %11 : vector<16xf32> to vector<16x1xf32>
      %cst_9 = arith.constant 1.000000e-24 : f32
      %13 = vector.broadcast %cst_9 : f32 to vector<16x1xf32>
      %14 = arith.maximumf %12, %13 : vector<16x1xf32>
      %15 = tpu.reciprocal %14 {approx = true} : vector<16x1xf32> -> vector<16x1xf32>
      %16 = vector.broadcast %15 : vector<16x1xf32> to vector<16x256xf32>
      %17 = arith.mulf %10, %16 : vector<16x256xf32>
      %cst_10 = arith.constant dense<0.000000e+00> : vector<256xf32>
      %18 = vector.multi_reduction <add>, %17, %cst_10 [0] : vector<16x256xf32> to vector<256xf32>
      %19 = vector.shape_cast %18 : vector<256xf32> to vector<1x256xf32>
      %20 = vector.shape_cast %19 : vector<1x256xf32> to vector<1x1x256xf32>
      %c0_11 = arith.constant 0 : index
      %c0_12 = arith.constant 0 : index
      %c0_13 = arith.constant 0 : index
      %21 = vector.load %arg6[%c0_11, %c0_12, %c0_13] : memref<1x1x256xf32, #tpu.memory_space<vmem>>, vector<1x1x256xf32>
      tpu.vector_store %arg6[%c0_11, %c0_12, %c0_13], %20 {strides = array<i32>} : memref<1x1x256xf32, #tpu.memory_space<vmem>>, vector<1x1x256xf32>,
    } else {
    }
    return
  }
  func.func @transform_0(%arg0: i32, %arg1: i32) -> (i32, i32) {
    %c0_i32 = arith.constant 0 : i32
    %c0_i32_0 = arith.constant 0 : i32
    return %arg0, %c0_i32 : i32, i32
  }
  func.func @transform_1(%arg0: i32, %arg1: i32) -> (i32, i32) {
    %c0_i32 = arith.constant 0 : i32
    %c0_i32_0 = arith.constant 0 : i32
    return %c0_i32, %arg1 : i32, i32
  }
  func.func @transform_2(%arg0: i32, %arg1: i32) -> (i32, i32) {
    %c0_i32 = arith.constant 0 : i32
    %c0_i32_0 = arith.constant 0 : i32
    return %c0_i32, %arg1 : i32, i32
  }
  func.func @transform_3(%arg0: i32, %arg1: i32) -> (i32, i32) {
    %c0_i32 = arith.constant 0 : i32
    return %arg0, %arg1 : i32, i32
  }
  func.func @transform_4(%arg0: i32, %arg1: i32) -> (i32, i32, i32) {
    %c0_i32 = arith.constant 0 : i32
    %c0_i32_0 = arith.constant 0 : i32
    %c0_i32_1 = arith.constant 0 : i32
    return %arg0, %c0_i32, %c0_i32_0 : i32, i32, i32
  }
}

</mosaic_0001>

<llo_original>
// kernel: tpu_custom_call.1
$region0: #{tpu_custom_call.1}
  #allocation0 [shape = 'u32[]', space=smem, size = 0x4, offset = 0x4, fixed_abs, tag = 'smem constant byte address 0x4 - core index']
  #allocation1 [shape = 'u32[144,128]{1,0:T(1,128)}', space=vmem, size = 0x12000, scoped, tag = 'internal scratch']
  %s0 = inlined_call_operand.hbm [shape: f32[16,256], index: 0, kind: input, shape index: {}]
  %s1 = inlined_call_operand.hbm [shape: f32[256,128], index: 1, kind: input, shape index: {}]
  %s2 = inlined_call_operand.vmem [shape: f32[1,128], index: 2, kind: input, shape index: {}]
  %s3 = inlined_call_operand.hbm [shape: f32[16,128], index: 3, kind: output, shape index: {0}]
  %s4 = inlined_call_operand.hbm [shape: f32[1,1,256], index: 4, kind: output, shape index: {1}]
  %5 = xla_tuple %s3, %s4
  %s6 = sld [smem:[#allocation0]]
  $region42: #{tpu_custom_call.1} parent=0
    _
  %s8 = ssub.s32 1, %s6
  %s9 = scalar_select 0, %s8, %s6
  $region1: #{tpu_custom_call.1} parent=0
    #allocation2 [shape = 'u8[16384]{0}', space=vmem, size = 0x4000, scoped, tag = 'input window, operand 0, single buffered']
    #allocation3 [shape = 's32[1]{0}', space=sflag, size = 0x4, scoped, tag = 'scoped memory for tpu_custom_call.1']
    #allocation4 [shape = 's32[1]{0}', space=sflag, size = 0x4, scoped, tag = 'scoped memory for tpu_custom_call.1']
    #allocation5 [shape = 'u8[131072]{0}', space=vmem, size = 0x20000, scoped, tag = 'input window, operand 1, single buffered']
    #allocation6 [shape = 's32[1]{0}', space=sflag, size = 0x4, scoped, tag = 'scoped memory for tpu_custom_call.1']
    #allocation7 [shape = 'u8[8192]{0}', space=vmem, size = 0x2000, scoped, tag = 'output window, operand 0, single buffered']
    #allocation8 [shape = 'u8[1024]{0}', space=vmem, size = 0x400, scoped, tag = 'output window, operand 1, single buffered']
    #allocation9 [shape = 's32[1]{0}', space=sflag, size = 0x4, scoped, tag = 'scoped memory for tpu_custom_call.1']
    %10 = vsyncpa [#allocation3], 0
    %11 = vsyncpa [#allocation6], 0
    %12 = vsyncpa [#allocation4], 0
    %13 = vsyncpa [#allocation9], 0
    // Predicated region
    $region2: #{tpu_custom_call.1} parent=1 // pred_check
      _
    $region3: #{tpu_custom_call.1} parent=1 // pred_check_branch
      %15 = sbr.rel (0) target = $region5
    $region4: #{tpu_custom_call.1} parent=1 // pred_region
      %s17 = ssub.s32 512, 512
      %18 = vsyncadd [#allocation3], %s17
      %s19 = sshll.u32 [#allocation2], 4
      %s20 = int_to_ptr.vmem [resolvable:$true] %s19
      %25 = dma.hbm_to_vmem [thread:$0]  %s0, 512, %s20, [#allocation3], 256, 256, 16
    $region5: #{tpu_custom_call.1} parent=1 // pred_fallthru
      _
    // Predicated region
    $region6: #{tpu_custom_call.1} parent=1 // pred_check
      _
    $region7: #{tpu_custom_call.1} parent=1 // pred_check_branch
      %27 = sbr.rel (0) target = $region9
    $region8: #{tpu_custom_call.1} parent=1 // pred_region
      %s29 = ssub.s32 4096, 4096
      %30 = vsyncadd [#allocation6], %s29
      %s31 = sshll.u32 [#allocation5], 4
      %s32 = int_to_ptr.vmem [resolvable:$true] %s31
      %37 = dma.hbm_to_vmem [thread:$0]  %s1, 4096, %s32, [#allocation6], 128, 128, 8
    $region9: #{tpu_custom_call.1} parent=1 // pred_fallthru
      _
    // Predicated region
    $region10: #{tpu_custom_call.1} parent=1 // pred_check
      _
    $region11: #{tpu_custom_call.1} parent=1 // pred_check_branch
      %39 = sbr.rel (0) target = $region13
    $region12: #{tpu_custom_call.1} parent=1 // pred_region
      _
    $region13: #{tpu_custom_call.1} parent=1 // pred_fallthru
      _
    // Predicated region
    $region14: #{tpu_custom_call.1} parent=1 // pred_check
      _
    $region15: #{tpu_custom_call.1} parent=1 // pred_check_branch
      %41 = sbr.rel (0) target = $region17
    $region16: #{tpu_custom_call.1} parent=1 // pred_region
      %42 = dma.done [#allocation3], 512
    $region17: #{tpu_custom_call.1} parent=1 // pred_fallthru
      _
    // Predicated region
    $region18: #{tpu_custom_call.1} parent=1 // pred_check
      _
    $region19: #{tpu_custom_call.1} parent=1 // pred_check_branch
      %44 = sbr.rel (0) target = $region21
    $region20: #{tpu_custom_call.1} parent=1 // pred_region
      %45 = dma.done [#allocation6], 4096
    $region21: #{tpu_custom_call.1} parent=1 // pred_fallthru
      _
    %v46 = vld [vmem:[#allocation2] sm:$0xff]
    %v47 = vld [vmem:[#allocation2 + $0x8] sm:$0xff]
    %v48 = vld [vmem:[#allocation2 + $0x10] sm:$0xff]
    %v49 = vld [vmem:[#allocation2 + $0x18] sm:$0xff]
    %v50 = vld [vmem:[#allocation5] sm:$0xff]
    %v51 = vld [vmem:[#allocation5 + $0x8] sm:$0xff]
    %v52 = vld [vmem:[#allocation5 + $0x10] sm:$0xff]
    %v53 = vld [vmem:[#allocation5 + $0x18] sm:$0xff]
    %v54 = vld [vmem:[#allocation5 + $0x20] sm:$0xff]
    %v55 = vld [vmem:[#allocation5 + $0x28] sm:$0xff]
    %v56 = vld [vmem:[#allocation5 + $0x30] sm:$0xff]
    %v57 = vld [vmem:[#allocation5 + $0x38] sm:$0xff]
    %v58 = vld [vmem:[#allocation5 + $0x40] sm:$0xff]
    %v59 = vld [vmem:[#allocation5 + $0x48] sm:$0xff]
    %v60 = vld [vmem:[#allocation5 + $0x50] sm:$0xff]
    %v61 = vld [vmem:[#allocation5 + $0x58] sm:$0xff]
    %v62 = vld [vmem:[#allocation5 + $0x60] sm:$0xff]
    %v63 = vld [vmem:[#allocation5 + $0x68] sm:$0xff]
    %v64 = vld [vmem:[#allocation5 + $0x70] sm:$0xff]
    %v65 = vld [vmem:[#allocation5 + $0x78] sm:$0xff]
    %v66 = vld [vmem:[#allocation5 + $0x80] sm:$0xff]
    %v67 = vld [vmem:[#allocation5 + $0x88] sm:$0xff]
    %v68 = vld [vmem:[#allocation5 + $0x90] sm:$0xff]
    %v69 = vld [vmem:[#allocation5 + $0x98] sm:$0xff]
    %v70 = vld [vmem:[#allocation5 + $0xa0] sm:$0xff]
    %v71 = vld [vmem:[#allocation5 + $0xa8] sm:$0xff]
    %v72 = vld [vmem:[#allocation5 + $0xb0] sm:$0xff]
    %v73 = vld [vmem:[#allocation5 + $0xb8] sm:$0xff]
    %v74 = vld [vmem:[#allocation5 + $0xc0] sm:$0xff]
    %v75 = vld [vmem:[#allocation5 + $0xc8] sm:$0xff]
    %v76 = vld [vmem:[#allocation5 + $0xd0] sm:$0xff]
    %v77 = vld [vmem:[#allocation5 + $0xd8] sm:$0xff]
    %v78 = vld [vmem:[#allocation5 + $0xe0] sm:$0xff]
    %v79 = vld [vmem:[#allocation5 + $0xe8] sm:$0xff]
    %v80 = vld [vmem:[#allocation5 + $0xf0] sm:$0xff]
    %v81 = vld [vmem:[#allocation5 + $0xf8] sm:$0xff]
    %v82 = vld [vmem:[%s2] sm:$0x1]
    %v84 = vlaneseq
    %v85 = vshrl.u32 %v84, 7
    %v86 = vsub.s32 0, %v85
    %v87 = vrot.slane %v82, %v86
    %89 = vmatprep.subr.mxu0 0.0
    %90 = vmatpush1.msra.mxu0 %v65
    %91 = vmatprep.subr.mxu0 0.0
    %92 = vmatpush1.msra.mxu0 %v64
    %93 = vmatprep.subr.mxu0 0.0
    %94 = vmatpush1.msra.mxu0 %v63
    %95 = vmatprep.subr.mxu0 0.0
    %96 = vmatpush1.msra.mxu0 %v62
    %97 = vmatprep.subr.mxu0 0.0
    %98 = vmatpush1.msra.mxu0 %v61
    %99 = vmatprep.subr.mxu0 0.0
    %100 = vmatpush1.msra.mxu0 %v60
    %101 = vmatprep.subr.mxu0 0.0
    %102 = vmatpush1.msra.mxu0 %v59
    %103 = vmatprep.subr.mxu0 0.0
    %104 = vmatpush1.msra.mxu0 %v58
    %105 = vmatprep.subr.mxu0 0.0
    %106 = vmatpush1.msra.mxu0 %v57
    %107 = vmatprep.subr.mxu0 0.0
    %108 = vmatpush1.msra.mxu0 %v56
    %109 = vmatprep.subr.mxu0 0.0
    %110 = vmatpush1.msra.mxu0 %v55
    %111 = vmatprep.subr.mxu0 0.0
    %112 = vmatpush1.msra.mxu0 %v54
    %113 = vmatprep.subr.mxu0 0.0
    %114 = vmatpush1.msra.mxu0 %v53
    %115 = vmatprep.subr.mxu0 0.0
    %116 = vmatpush1.msra.mxu0 %v52
    %117 = vmatprep.subr.mxu0 0.0
    %118 = vmatpush1.msra.mxu0 %v51
    %119 = vmatprep.subr.mxu0 0.0
    %120 = vmatpush1.msra.mxu0 %v50
    %121 = vmatprep.subr.mxu0 0.0
    %122 = vmatpush2.msra.mxu0 %v81
    %123 = vmatprep.subr.mxu0 0.0
    %124 = vmatpush2.msra.mxu0 %v80
    %125 = vmatprep.subr.mxu0 0.0
    %126 = vmatpush2.msra.mxu0 %v79
    %127 = vmatprep.subr.mxu0 0.0
    %128 = vmatpush2.msra.mxu0 %v78
    %129 = vmatprep.subr.mxu0 0.0
    %130 = vmatpush2.msra.mxu0 %v77
    %131 = vmatprep.subr.mxu0 0.0
    %132 = vmatpush2.msra.mxu0 %v76
    %133 = vmatprep.subr.mxu0 0.0
    %134 = vmatpush2.msra.mxu0 %v75
    %135 = vmatprep.subr.mxu0 0.0
    %136 = vmatpush2.msra.mxu0 %v74
    %137 = vmatprep.subr.mxu0 0.0
    %138 = vmatpush2.msra.mxu0 %v73
    %139 = vmatprep.subr.mxu0 0.0
    %140 = vmatpush2.msra.mxu0 %v72
    %141 = vmatprep.subr.mxu0 0.0
    %142 = vmatpush2.msra.mxu0 %v71
    %143 = vmatprep.subr.mxu0 0.0
    %144 = vmatpush2.msra.mxu0 %v70
    %145 = vmatprep.subr.mxu0 0.0
    %146 = vmatpush2.msra.mxu0 %v69
    %147 = vmatprep.subr.mxu0 0.0
    %148 = vmatpush2.msra.mxu0 %v68
    %149 = vmatprep.subr.mxu0 0.0
    %150 = vmatpush2.msra.mxu0 %v67
    %151 = vmatprep.subr.mxu0 0.0
    %152 = vmatpush2.msra.mxu0 %v66
    %153 = vmatprep.mubr.f32.mxu0 %v47
    %154 = vmatmul.mubr.f32.gmra.mxu0 %v46
    %v155 = vpop.f32.mrf.mxu0
    %v156 = vadd.f32 %v87, %v155
    %v157 = vpop.f32.mrf.mxu0
    %158 = vmatprep.mubr.f32.mxu0 %v49
    %159 = vmatmul.mubr.f32.gmra.mxu0 %v48
    %v160 = vpop.f32.mrf.mxu0
    %v161 = vadd.f32 %v87, %v160
    %v162 = vpop.f32.mrf.mxu0
    %163 = vdwg.mxu0
    %164 = vst [vmem:[#allocation7] sm:$0xff] %v156
    %165 = vst [vmem:[#allocation7 + $0x8] sm:$0xff] %v161
    %p166 = scmp.eq.s32.totalorder 0, 0
    // Predicated region
    $region22: #{tpu_custom_call.1} parent=1 // pred_check
      %p167 = pneg %p166
    $region23: #{tpu_custom_call.1} parent=1 // pred_check_branch
      %169 = sbr.rel (%p167) target = $region25
    $region24: #{tpu_custom_call.1} parent=1 // pred_region
      %v170 = vmul.f32 %v46, %v46
      %v171 = vmul.f32 %v47, %v47
      %v172 = vmul.f32 %v48, %v48
      %v173 = vmul.f32 %v49, %v49
      %v174 = vadd.f32 %v170, %v171
      %175 = vadd.xlane.f32.xlu0 %v174
      %v176 = vpop.xlane.xlu0 %175
      %v177 = vadd.f32 %v172, %v173
      %178 = vadd.xlane.f32.xlu0 %v177
      %v179 = vpop.xlane.xlu0 %178
      %v180 = vmax.f32 %v176, 1e-24
      %v181 = vmax.f32 %v179, 1e-24
      %v182 = vrcp.pop %v180
      %v183 = vrcp.pop %v181
      %v184 = vmul.f32 %v170, %v182
      %v185 = vmul.f32 %v171, %v182
      %v186 = vmul.f32 %v172, %v183
      %v187 = vmul.f32 %v173, %v183
      %v188 = vadd.f32 %v184, %v186
      %v189 = vrot.slane %v188, 4
      %v190 = vadd.f32 %v188, %v189
      %v191 = vrot.slane %v190, 2
      %v192 = vadd.f32 %v190, %v191
      %v193 = vrot.slane %v192, 1
      %v194 = vadd.f32 %v192, %v193
      %v195 = vadd.f32 %v185, %v187
      %v196 = vrot.slane %v195, 4
      %v197 = vadd.f32 %v195, %v196
      %v198 = vrot.slane %v197, 2
      %v199 = vadd.f32 %v197, %v198
      %v200 = vrot.slane %v199, 1
      %v201 = vadd.f32 %v199, %v200
      %v204 = vcombine.low %v194, %v201
      %v206 = vunpack.c.l.s4 1966171168
      %v207 = vunpack.c.0.s8 %v206
      %v208 = vlaneseq
      %v209 = vshrl.u32 %v208, 7
      %v210 = vsub.s32 %v207, %v209
      %v211 = vrot.slane %v204, %v210
      %v213 = vunpack.c.l.s4 1966171168
      %v214 = vunpack.c.0.s8 %v213
      %v215 = vlaneseq
      %v216 = vshrl.u32 %v215, 7
      %v217 = vsub.s32 %v214, %v216
      %v218 = vrot.slane %v211, %v217
      %v220 = vlaneseq
      %vm221 = vcmp.ge.s32.totalorder %v220, 0
      %vm222 = vcmp.lt.s32.totalorder %v220, 256
      %vm223 = vmand %vm221, %vm222
      %224 = vst.msk [vmem:[#allocation8] sm:$0x3] %vm223, %v218
    $region25: #{tpu_custom_call.1} parent=1 // pred_fallthru
      _
    // Predicated region
    $region26: #{tpu_custom_call.1} parent=1 // pred_check
      _
    $region27: #{tpu_custom_call.1} parent=1 // pred_check_branch
      %226 = sbr.rel (0) target = $region29
    $region28: #{tpu_custom_call.1} parent=1 // pred_region
      %s228 = ssub.s32 256, 256
      %229 = vsyncadd [#allocation4], %s228
      %s230 = sshll.u32 [#allocation7], 4
      %s231 = int_to_ptr.vmem [resolvable:$true] %s230
      %236 = dma.vmem_to_hbm [thread:$0]  %s231, 256, %s3, [#allocation4], 128, 128, 8
    $region29: #{tpu_custom_call.1} parent=1 // pred_fallthru
      _
    // Predicated region
    $region30: #{tpu_custom_call.1} parent=1 // pred_check
      _
    $region31: #{tpu_custom_call.1} parent=1 // pred_check_branch
      %238 = sbr.rel (0) target = $region33
    $region32: #{tpu_custom_call.1} parent=1 // pred_region
      %s240 = ssub.s32 32, 32
      %241 = vsyncadd [#allocation9], %s240
      %s243 = sshll.u32 [#allocation8], 4
      %s244 = int_to_ptr.vmem [resolvable:$true] %s243
      %246 = dma.vmem_to_hbm [thread:$0]  %s244, 32, %s4, [#allocation9]
    $region33: #{tpu_custom_call.1} parent=1 // pred_fallthru
      _
    // Predicated region
    $region34: #{tpu_custom_call.1} parent=1 // pred_check
      _
    $region35: #{tpu_custom_call.1} parent=1 // pred_check_branch
      %248 = sbr.rel (0) target = $region37
    $region36: #{tpu_custom_call.1} parent=1 // pred_region
      %249 = dma.done [#allocation4], 256
    $region37: #{tpu_custom_call.1} parent=1 // pred_fallthru
      _
    // Predicated region
    $region38: #{tpu_custom_call.1} parent=1 // pred_check
      _
    $region39: #{tpu_custom_call.1} parent=1 // pred_check_branch
      %251 = sbr.rel (0) target = $region41
    $region40: #{tpu_custom_call.1} parent=1 // pred_region
      %252 = dma.done [#allocation9], 32
    $region41: #{tpu_custom_call.1} parent=1 // pred_fallthru
      _
    %253 = vsyncpa [#allocation3], 1
    %254 = vsyncpa [#allocation6], 1
    %255 = vsyncpa [#allocation4], 1
    %256 = vsyncpa [#allocation9], 1

</llo_original>
